<compile_context>
chip_gen: v7x
topology: tpu7x:2x2x1
jax: 0.10.0
libtpu: 0.0.40
codegen_flags: <defaults>
</compile_context>

<pallas_src>
import functools

import jax
import jax.numpy as jnp
from jax.experimental import pallas as pl
from jax.experimental.pallas import tpu as pltpu


def _round_up(x, m):
    return ((x + m - 1) // m) * m


# ----------------------------------------------------------------------------
# Kernels
# ----------------------------------------------------------------------------
def _mlp_resident_kernel(x_ref, w1_ref, b1_ref, w2_ref, b2_ref, o_ref):
    """Weights fully VMEM-resident: one grid step per token tile.

    x_ref  : (TM, E)   token tile
    w1_ref : (E, F)    linear1 weight, pre-transposed (contract K on MXU)
    b1_ref : (1, F)    linear1 bias (f32)
    w2_ref : (F, E)    linear2 weight, pre-transposed
    b2_ref : (1, E)    linear2 bias (f32)
    o_ref  : (TM, E)   output tile
    """
    h = jnp.dot(x_ref[...], w1_ref[...], preferred_element_type=jnp.float32)
    h = jnp.maximum(h + b1_ref[...], 0.0)                       # bias + ReLU
    # TODO(synk): dropout is identity here (inference / dropout=None); a
    # training-mode port would mask h via pltpu.prng_seed + prng_random_bits.
    out = jnp.dot(h.astype(w2_ref.dtype), w2_ref[...],
                  preferred_element_type=jnp.float32)
    o_ref[...] = (out + b2_ref[...]).astype(o_ref.dtype)


def _mlp_stream_kernel(x_ref, w1_ref, b1_ref, w2_ref, b2_ref, o_ref, acc_ref):
    """Hidden dim F streamed as the last ('arbitrary') grid axis.

    w1_ref : (E, TF) slice, b1_ref : (1, TF) slice, w2_ref : (TF, E) slice.
    acc_ref: (TM, E) f32 accumulator, resident across the F axis.
    """
    f = pl.program_id(1)

    @pl.when(f == 0)
    def _():
        # Fold b2 into the accumulator init (saves an epilogue VPU add).
        acc_ref[...] = jnp.broadcast_to(b2_ref[...], acc_ref.shape)

    h = jnp.dot(x_ref[...], w1_ref[...], preferred_element_type=jnp.float32)
    h = jnp.maximum(h + b1_ref[...], 0.0)                       # bias + ReLU
    acc_ref[...] += jnp.dot(h.astype(w2_ref.dtype), w2_ref[...],
                            preferred_element_type=jnp.float32)

    @pl.when(f == pl.num_programs(1) - 1)
    def _():
        o_ref[...] = acc_ref[...].astype(o_ref.dtype)


# ----------------------------------------------------------------------------
# VMEM sizing
# ----------------------------------------------------------------------------
def _vmem_budget():
    try:
        cap = int(pltpu.get_tpu_info().vmem_capacity_bytes)
    except Exception:                       # pragma: no cover - info unavailable
        cap = 64 << 20                      # conservative (v7x per-TensorCore)
    budget = int(cap * 0.75)                # ~48 MiB on v7x, ~96 MiB on v5e/v6e
    limit_cap = int(cap * 0.90)             # ceiling for vmem_limit_bytes
    return budget, limit_cap


def _resident_vmem_bytes(tm, e_pad, f_pad, itemsize):
    return (2 * tm * e_pad * itemsize          # x tile (double-buffered)
            + 2 * e_pad * f_pad * itemsize     # W1^T (resident; 2 bufs worst-case)
            + 2 * 8 * f_pad * 4                # b1 (f32, padded to 8 sublanes)
            + 2 * f_pad * e_pad * itemsize     # W2^T
            + 2 * 8 * e_pad * 4                # b2
            + 2 * tm * e_pad * itemsize        # out tile
            + tm * f_pad * 4                   # f32 hidden intermediate h
            + tm * e_pad * 4                   # f32 second-matmul result
            + (2 << 20))                       # compiler internal scratch margin


def _stream_vmem_bytes(tm, tf, e_pad, itemsize):
    return (2 * tm * e_pad * itemsize          # x tile
            + 2 * e_pad * tf * itemsize        # W1^T slice
            + 2 * 8 * tf * 4                   # b1 slice
            + 2 * tf * e_pad * itemsize        # W2^T slice
            + 2 * 8 * e_pad * 4                # b2
            + 2 * tm * e_pad * itemsize        # out tile
            + tm * e_pad * 4                   # f32 accumulator scratch
            + tm * tf * 4                      # f32 hidden intermediate h
            + (2 << 20))


# ----------------------------------------------------------------------------
# Wrapper
# ----------------------------------------------------------------------------
@functools.partial(jax.jit, static_argnames=("tile_m", "tile_f", "compute_dtype"))
def mlp_forward(x, w1, b1, w2, b2, tile_m=None, tile_f=None, compute_dtype=None):
    """x: (B, S, E). w1: (F, E), b1: (F,), w2: (E, F), b2: (E,) (PyTorch layouts).

    Computes linear2(relu(linear1(x))); dropout is identity (inference).
    Pass compute_dtype=jnp.bfloat16 for full MXU rate; accumulation stays f32
    and the output keeps x.dtype.
    """
    B, S, E = x.shape
    F = w1.shape[0]
    M = B * S
    if compute_dtype is None:
        compute_dtype = x.dtype
    compute_dtype = jnp.dtype(compute_dtype)
    itemsize = compute_dtype.itemsize

    budget, limit_cap = _vmem_budget()

    # Lane-dim padding: leave tiny dims unpadded (full-dim blocks are legal and
    # padding 32->128 would inflate FLOPs/DMA 4x); pad larger dims to 128.
    e_pad = E if E <= 128 else _round_up(E, 128)
    f_pad128 = F if F <= 128 else _round_up(F, 128)

    # ---- token-tile size ----------------------------------------------------
    if tile_m is None:
        tile_m = min(1024, _round_up(M, 16))
        # Keep the "parallel" M axis at >= 2 tiles when there is enough work so
        # v7x's two TensorCores both get a share.
        if tile_m >= M and M >= 256:
            tile_m = _round_up((M + 1) // 2, 16)

    # ---- path selection: VMEM-resident weights vs. F-streaming ---------------
    use_resident = False
    tm = tile_m
    while True:
        if _resident_vmem_bytes(tm, e_pad, f_pad128, itemsize) <= budget:
            use_resident = True
            tile_m = tm
            break
        if tm <= 256:
            break
        tm = max(256, _round_up(tm // 2, 16))

    if use_resident:
        f_pad = f_pad128
        grid_f = 1
        vmem_need = _resident_vmem_bytes(tile_m, e_pad, f_pad, itemsize)
    else:
        if tile_f is None:
            tile_f = 512 if f_pad128 >= 512 else f_pad128
        # Shrink tile_f before tile_m (weight re-streaming scales with the
        # number of M tiles); floor tile_f at 256 first, then back off tile_m.
        while _stream_vmem_bytes(tile_m, tile_f, e_pad, itemsize) > budget:
            if tile_f > 256:
                tile_f //= 2
            elif tile_m > 256:
                tile_m = max(256, _round_up(tile_m // 2, 16))
            elif tile_f > 128:
                tile_f //= 2
            elif tile_m > 128:
                tile_m = max(128, _round_up(tile_m // 2, 16))
            else:
                break
        f_pad = _round_up(F, tile_f)
        grid_f = f_pad // tile_f
        vmem_need = _stream_vmem_bytes(tile_m, tile_f, e_pad, itemsize)

    m_pad = _round_up(M, tile_m)
    grid_m = m_pad // tile_m

    # ---- one-time layout prep (pad + transpose weights, cast) ----------------
    x2d = x.reshape(M, E).astype(compute_dtype)
    if (m_pad, e_pad) != (M, E):
        x2d = jnp.pad(x2d, ((0, m_pad - M), (0, e_pad - E)))

    w1_t = w1.T.astype(compute_dtype)                      # (E, F)
    if (e_pad, f_pad) != (E, F):
        w1_t = jnp.pad(w1_t, ((0, e_pad - E), (0, f_pad - F)))
    w2_t = w2.T.astype(compute_dtype)                      # (F, E)
    if (f_pad, e_pad) != (F, E):
        w2_t = jnp.pad(w2_t, ((0, f_pad - F), (0, e_pad - E)))

    b1_p = b1.astype(jnp.float32)
    if f_pad != F:
        b1_p = jnp.pad(b1_p, (0, f_pad - F))
    b1_p = b1_p.reshape(1, f_pad)
    b2_p = b2.astype(jnp.float32)
    if e_pad != E:
        b2_p = jnp.pad(b2_p, (0, e_pad - E))
    b2_p = b2_p.reshape(1, e_pad)

    # ---- cost / compiler params ----------------------------------------------
    flops = 4 * m_pad * f_pad * e_pad            # two matmuls, 2 flops per MAC
    weight_bytes = 2 * e_pad * f_pad * itemsize + 4 * (e_pad + f_pad)
    io_bytes = 2 * m_pad * e_pad * itemsize
    bytes_accessed = io_bytes + (weight_bytes if use_resident
                                 else grid_m * weight_bytes)
    vmem_limit = min(limit_cap,
                     max(int(vmem_need * 1.25) + (8 << 20), 32 << 20))

    if use_resident:
        grid = (grid_m,)
        in_specs = [
            pl.BlockSpec((tile_m, e_pad), lambda i: (i, 0)),   # x tile
            pl.BlockSpec((e_pad, f_pad),  lambda i: (0, 0)),   # W1^T (resident)
            pl.BlockSpec((1, f_pad),      lambda i: (0, 0)),   # b1
            pl.BlockSpec((f_pad, e_pad),  lambda i: (0, 0)),   # W2^T (resident)
            pl.BlockSpec((1, e_pad),      lambda i: (0, 0)),   # b2
        ]
        out_specs = pl.BlockSpec((tile_m, e_pad), lambda i: (i, 0))
        scratch_shapes = []
        kernel = _mlp_resident_kernel
        dim_sem = ("parallel",)
    else:
        grid = (grid_m, grid_f)
        in_specs = [
            pl.BlockSpec((tile_m, e_pad), lambda i, f: (i, 0)),   # x tile
            pl.BlockSpec((e_pad, tile_f), lambda i, f: (0, f)),   # W1^T slice
            pl.BlockSpec((1, tile_f),     lambda i, f: (0, f)),   # b1 slice
            pl.BlockSpec((tile_f, e_pad), lambda i, f: (f, 0)),   # W2^T slice
            pl.BlockSpec((1, e_pad),      lambda i, f: (0, 0)),   # b2
        ]
        out_specs = pl.BlockSpec((tile_m, e_pad), lambda i, f: (i, 0))
        scratch_shapes = [pltpu.VMEM((tile_m, e_pad), jnp.float32)]
        kernel = _mlp_stream_kernel
        dim_sem = ("parallel", "arbitrary")

    out2d = pl.pallas_call(
        kernel,
        out_shape=jax.ShapeDtypeStruct((m_pad, e_pad), x.dtype),
        grid_spec=pltpu.PrefetchScalarGridSpec(
            num_scalar_prefetch=0,
            grid=grid,
            in_specs=in_specs,
            out_specs=out_specs,
            scratch_shapes=scratch_shapes),
        compiler_params=pltpu.CompilerParams(
            dimension_semantics=dim_sem,
            vmem_limit_bytes=vmem_limit),
        cost_estimate=pl.CostEstimate(
            flops=flops, transcendentals=0, bytes_accessed=bytes_accessed),
    )(x2d, w1_t, b1_p, w2_t, b2_p)

    return out2d[:M, :E].reshape(B, S, E)


# ----------------------------------------------------------------------------
# Demo / self-check
# ----------------------------------------------------------------------------
def _xavier_uniform(key, fan_out, fan_in, dtype=jnp.float32):
    limit = (6.0 / (fan_in + fan_out)) ** 0.5
    return jax.random.uniform(key, (fan_out, fan_in), dtype=dtype,
                              minval=-limit, maxval=limit)


if __name__ == "__main__":
    # Small shapes consistent with the module: batch=2, seq=8, embed=32, ff=64.
    B, S, E, F = 2, 8, 32, 64

    key = jax.random.PRNGKey(0)
    k_x, k_w1, k_b1, k_w2, k_b2 = jax.random.split(key, 5)

    x = jax.random.normal(k_x, (B, S, E), dtype=jnp.float32)

    # Deterministic init matching _reset_parameters:
    #   xavier_uniform on weights, normal(mean=1e-6, std=1) on biases.
    w1 = _xavier_uniform(k_w1, F, E)                        # (F, E) torch layout
    b1 = 1e-6 + jax.random.normal(k_b1, (F,), jnp.float32)
    w2 = _xavier_uniform(k_w2, E, F)                        # (E, F) torch layout
    b2 = 1e-6 + jax.random.normal(k_b2, (E,), jnp.float32)

    out = jax.block_until_ready(mlp_forward(x, w1, b1, w2, b2))

    # Reference in plain JAX at highest matmul precision.
    mm = functools.partial(jnp.matmul, precision=jax.lax.Precision.HIGHEST)
    ref = mm(jnp.maximum(mm(x, w1.T) + b1, 0.0), w2.T) + b2

    assert out.shape == (B, S, E)
    assert jnp.allclose(out, ref, atol=1e-3, rtol=1e-3), "mismatch vs reference"

    print("KERNEL_OK")
</pallas_src>

<mosaic_0001>
module attributes {stable_mosaic.version = 11 : i64} {
  func.func @_mlp_resident_kernel(%arg0: i32, %arg1: memref<16x32xf32, #tpu.memory_space<vmem>>, %arg2: memref<32x64xf32, #tpu.memory_space<vmem>>, %arg3: memref<1x64xf32, #tpu.memory_space<vmem>>, %arg4: memref<64x32xf32, #tpu.memory_space<vmem>>, %arg5: memref<1x32xf32, #tpu.memory_space<vmem>>, %arg6: memref<16x32xf32, #tpu.memory_space<vmem>>) attributes {dimension_semantics = [#tpu.dimension_semantics<parallel>], iteration_bounds = array<i64: 1>, scalar_prefetch = 0 : i64, scratch_operands = 0 : i64, tpu.core_type = #tpu.core_type<tc>, window_params = [{transform_indices = @transform_0, window_bounds = array<i64: 16, 32>}, {pipeline_mode = #tpu.pipeline_mode<synchronous>, transform_indices = @transform_1, window_bounds = array<i64: 32, 64>}, {pipeline_mode = #tpu.pipeline_mode<synchronous>, transform_indices = @transform_2, window_bounds = array<i64: 1, 64>}, {pipeline_mode = #tpu.pipeline_mode<synchronous>, transform_indices = @transform_3, window_bounds = array<i64: 64, 32>}, {pipeline_mode = #tpu.pipeline_mode<synchronous>, transform_indices = @transform_4, window_bounds = array<i64: 1, 32>}, {transform_indices = @transform_5, window_bounds = array<i64: 16, 32>}]} {
    %c0 = arith.constant 0 : index
    %c0_0 = arith.constant 0 : index
    %0 = vector.load %arg1[%c0, %c0_0] : memref<16x32xf32, #tpu.memory_space<vmem>>, vector<16x32xf32>
    %c0_1 = arith.constant 0 : index
    %c0_2 = arith.constant 0 : index
    %1 = vector.load %arg2[%c0_1, %c0_2] : memref<32x64xf32, #tpu.memory_space<vmem>>, vector<32x64xf32>
    %cst = arith.constant dense<0.000000e+00> : vector<16x64xf32>
    %2 = tpu.matmul %0, %1, %cst {dimension_numbers = #tpu.dot_dimension_numbers<[1], [0], [0], [1], [0, 0, 1, 1], [], []>} : vector<16x32xf32>, vector<32x64xf32>, vector<16x64xf32> -> vector<16x64xf32>
    %c0_3 = arith.constant 0 : index
    %c0_4 = arith.constant 0 : index
    %3 = vector.load %arg3[%c0_3, %c0_4] : memref<1x64xf32, #tpu.memory_space<vmem>>, vector<1x64xf32>
    %4 = vector.broadcast %3 : vector<1x64xf32> to vector<16x64xf32>
    %5 = arith.addf %2, %4 : vector<16x64xf32>
    %cst_5 = arith.constant 0.000000e+00 : f32
    %6 = vector.broadcast %cst_5 : f32 to vector<16x64xf32>
    %7 = arith.maximumf %5, %6 : vector<16x64xf32>
    %c0_6 = arith.constant 0 : index
    %c0_7 = arith.constant 0 : index
    %8 = vector.load %arg4[%c0_6, %c0_7] : memref<64x32xf32, #tpu.memory_space<vmem>>, vector<64x32xf32>
    %cst_8 = arith.constant dense<0.000000e+00> : vector<16x32xf32>
    %9 = tpu.matmul %7, %8, %cst_8 {dimension_numbers = #tpu.dot_dimension_numbers<[1], [0], [0], [1], [0, 0, 1, 1], [], []>} : vector<16x64xf32>, vector<64x32xf32>, vector<16x32xf32> -> vector<16x32xf32>
    %c0_9 = arith.constant 0 : index
    %c0_10 = arith.constant 0 : index
    %10 = vector.load %arg5[%c0_9, %c0_10] : memref<1x32xf32, #tpu.memory_space<vmem>>, vector<1x32xf32>
    %11 = vector.broadcast %10 : vector<1x32xf32> to vector<16x32xf32>
    %12 = arith.addf %9, %11 : vector<16x32xf32>
    %c0_11 = arith.constant 0 : index
    %c0_12 = arith.constant 0 : index
    %13 = vector.load %arg6[%c0_11, %c0_12] : memref<16x32xf32, #tpu.memory_space<vmem>>, vector<16x32xf32>
    tpu.vector_store %arg6[%c0_11, %c0_12], %12 {strides = array<i32>} : memref<16x32xf32, #tpu.memory_space<vmem>>, vector<16x32xf32>,
    return
  }
  func.func @transform_0(%arg0: i32) -> (i32, i32) {
    %c0_i32 = arith.constant 0 : i32
    %c0_i32_0 = arith.constant 0 : i32
    return %arg0, %c0_i32 : i32, i32
  }
  func.func @transform_1(%arg0: i32) -> (i32, i32) {
    %c0_i32 = arith.constant 0 : i32
    %c0_i32_0 = arith.constant 0 : i32
    %c0_i32_1 = arith.constant 0 : i32
    return %c0_i32, %c0_i32_0 : i32, i32
  }
  func.func @transform_2(%arg0: i32) -> (i32, i32) {
    %c0_i32 = arith.constant 0 : i32
    %c0_i32_0 = arith.constant 0 : i32
    %c0_i32_1 = arith.constant 0 : i32
    return %c0_i32, %c0_i32_0 : i32, i32
  }
  func.func @transform_3(%arg0: i32) -> (i32, i32) {
    %c0_i32 = arith.constant 0 : i32
    %c0_i32_0 = arith.constant 0 : i32
    %c0_i32_1 = arith.constant 0 : i32
    return %c0_i32, %c0_i32_0 : i32, i32
  }
  func.func @transform_4(%arg0: i32) -> (i32, i32) {
    %c0_i32 = arith.constant 0 : i32
    %c0_i32_0 = arith.constant 0 : i32
    %c0_i32_1 = arith.constant 0 : i32
    return %c0_i32, %c0_i32_0 : i32, i32
  }
  func.func @transform_5(%arg0: i32) -> (i32, i32) {
    %c0_i32 = arith.constant 0 : i32
    %c0_i32_0 = arith.constant 0 : i32
    return %arg0, %c0_i32 : i32, i32
  }
}

</mosaic_0001>

<llo_original>
// kernel: mlp_forward.1
$region0: #{mlp_forward.1}
  #allocation0 [shape = 'u32[]', space=smem, size = 0x4, offset = 0x4, fixed_abs, tag = 'smem constant byte address 0x4 - core index']
  #allocation1 [shape = 'u32[144,128]{1,0:T(1,128)}', space=vmem, size = 0x12000, scoped, tag = 'internal scratch']
  %s0 = inlined_call_operand.vmem [shape: f32[16,32], index: 0, kind: input, shape index: {}]
  %s1 = inlined_call_operand.vmem [shape: f32[32,64], index: 1, kind: input, shape index: {}]
  %s2 = inlined_call_operand.vmem [shape: f32[1,64], index: 2, kind: input, shape index: {}]
  %s3 = inlined_call_operand.vmem [shape: f32[64,32], index: 3, kind: input, shape index: {}]
  %s4 = inlined_call_operand.vmem [shape: f32[1,32], index: 4, kind: input, shape index: {}]
  %s5 = inlined_call_operand.hbm [shape: f32[16,32], index: 5, kind: output, shape index: {}]
  %s6 = sld [smem:[#allocation0]]
  $region30: #{mlp_forward.1} parent=0
    _
  %s8 = ssub.s32 1, %s6
  %s9 = scalar_select 0, %s8, %s6
  $region1: #{mlp_forward.1} parent=0
    #allocation2 [shape = 'u8[8192]{0}', space=vmem, size = 0x2000, scoped, tag = 'output window, operand 0, single buffered']
    #allocation3 [shape = 's32[1]{0}', space=sflag, size = 0x4, scoped, tag = 'scoped memory for mlp_forward.1']
    %10 = vsyncpa [#allocation3], 0
    // Predicated region
    $region2: #{mlp_forward.1} parent=1 // pred_check
      _
    $region3: #{mlp_forward.1} parent=1 // pred_check_branch
      %12 = sbr.rel (0) target = $region5
    $region4: #{mlp_forward.1} parent=1 // pred_region
      _
    $region5: #{mlp_forward.1} parent=1 // pred_fallthru
      _
    // Predicated region
    $region6: #{mlp_forward.1} parent=1 // pred_check
      _
    $region7: #{mlp_forward.1} parent=1 // pred_check_branch
      %14 = sbr.rel (0) target = $region9
    $region8: #{mlp_forward.1} parent=1 // pred_region
      _
    $region9: #{mlp_forward.1} parent=1 // pred_fallthru
      _
    // Predicated region
    $region10: #{mlp_forward.1} parent=1 // pred_check
      _
    $region11: #{mlp_forward.1} parent=1 // pred_check_branch
      %16 = sbr.rel (0) target = $region13
    $region12: #{mlp_forward.1} parent=1 // pred_region
      _
    $region13: #{mlp_forward.1} parent=1 // pred_fallthru
      _
    // Predicated region
    $region14: #{mlp_forward.1} parent=1 // pred_check
      _
    $region15: #{mlp_forward.1} parent=1 // pred_check_branch
      %18 = sbr.rel (0) target = $region17
    $region16: #{mlp_forward.1} parent=1 // pred_region
      _
    $region17: #{mlp_forward.1} parent=1 // pred_fallthru
      _
    // Predicated region
    $region18: #{mlp_forward.1} parent=1 // pred_check
      _
    $region19: #{mlp_forward.1} parent=1 // pred_check_branch
      %20 = sbr.rel (0) target = $region21
    $region20: #{mlp_forward.1} parent=1 // pred_region
      _
    $region21: #{mlp_forward.1} parent=1 // pred_fallthru
      _
    %v21 = vld [vmem:[%s0] sm:$0xff]
    %v22 = vld [vmem:[%s0 + $0x8] sm:$0xff]
    %v23 = vld [vmem:[%s1] sm:$0xff]
    %v24 = vld [vmem:[%s1 + $0x8] sm:$0xff]
    %v25 = vld [vmem:[%s1 + $0x10] sm:$0xff]
    %v26 = vld [vmem:[%s1 + $0x18] sm:$0xff]
    %v27 = vld [vmem:[%s2] sm:$0x1]
    %v29 = vlaneseq
    %v30 = vshrl.u32 %v29, 7
    %v31 = vsub.s32 0, %v30
    %v32 = vrot.slane %v27, %v31
    %vm34 = vcmask 261120
    %v36 = vsel %vm34, %v21, 0
    %v39 = vsel %vm34, %v22, 0
    %41 = vmatprep.subr.mxu0 0.0
    %42 = vmatpush1.msra.mxu0 %v23
    %43 = vmatprep.subr.mxu0 0.0
    %44 = vmatpush1.msra.mxu0 %v24
    %45 = vmatprep.subr.mxu0 0.0
    %46 = vmatpush1.msra.mxu0 %v25
    %47 = vmatprep.subr.mxu0 0.0
    %48 = vmatpush1.msra.mxu0 %v26
    %49 = vmatprep.subr.mxu0 0.0
    %50 = vmatpush1.msra.mxu0 0.0
    %51 = vmatprep.subr.mxu0 0.0
    %52 = vmatpush1.msra.mxu0 0.0
    %53 = vmatprep.subr.mxu0 0.0
    %54 = vmatpush1.msra.mxu0 0.0
    %55 = vmatprep.subr.mxu0 0.0
    %56 = vmatpush1.msra.mxu0 0.0
    %57 = vmatprep.subr.mxu0 0.0
    %58 = vmatpush1.msra.mxu0 0.0
    %59 = vmatprep.subr.mxu0 0.0
    %60 = vmatpush1.msra.mxu0 0.0
    %61 = vmatprep.subr.mxu0 0.0
    %62 = vmatpush1.msra.mxu0 0.0
    %63 = vmatprep.subr.mxu0 0.0
    %64 = vmatpush1.msra.mxu0 0.0
    %65 = vmatprep.subr.mxu0 0.0
    %66 = vmatpush1.msra.mxu0 0.0
    %67 = vmatprep.subr.mxu0 0.0
    %68 = vmatpush1.msra.mxu0 0.0
    %69 = vmatprep.subr.mxu0 0.0
    %70 = vmatpush1.msra.mxu0 0.0
    %71 = vmatprep.subr.mxu0 0.0
    %72 = vmatpush1.msra.mxu0 0.0
    %73 = vmatprep.subr.mxu0 0.0
    %74 = vmatpush1.msra.mxu0 0.0
    %75 = vmatprep.subr.mxu0 0.0
    %76 = vmatpush1.msra.mxu0 0.0
    %77 = vmatprep.subr.mxu0 0.0
    %78 = vmatpush1.msra.mxu0 0.0
    %79 = vmatprep.subr.mxu0 0.0
    %80 = vmatpush1.msra.mxu0 0.0
    %81 = vmatprep.subr.mxu0 0.0
    %82 = vmatpush1.msra.mxu0 0.0
    %83 = vmatprep.subr.mxu0 0.0
    %84 = vmatpush1.msra.mxu0 0.0
    %85 = vmatprep.subr.mxu0 0.0
    %86 = vmatpush1.msra.mxu0 0.0
    %87 = vmatprep.subr.mxu0 0.0
    %88 = vmatpush1.msra.mxu0 0.0
    %89 = vmatprep.subr.mxu0 0.0
    %90 = vmatpush1.msra.mxu0 0.0
    %91 = vmatprep.subr.mxu0 0.0
    %92 = vmatpush1.msra.mxu0 0.0
    %93 = vmatprep.subr.mxu0 0.0
    %94 = vmatpush1.msra.mxu0 0.0
    %95 = vmatprep.subr.mxu0 0.0
    %96 = vmatpush1.msra.mxu0 0.0
    %97 = vmatprep.subr.mxu0 0.0
    %98 = vmatpush1.msra.mxu0 0.0
    %99 = vmatprep.subr.mxu0 0.0
    %100 = vmatpush1.msra.mxu0 0.0
    %101 = vmatprep.subr.mxu0 0.0
    %102 = vmatpush1.msra.mxu0 0.0
    %103 = vmatprep.subr.mxu0 0.0
    %104 = vmatpush1.msra.mxu0 0.0
    %105 = vmatprep.mubr.f32.mxu0 0.0
    %106 = vmatmul.mubr.f32.gmra.mrb[0].mxu0 %v36
    %v107 = vpop.f32.mrb[0].mxu0
    %v108 = vadd.f32 %v32, %v107
    %v109 = vpop.f32.mrb[0].mxu0
    %110 = vmatprep.mubr.f32.mxu0 0.0
    %111 = vmatmul.mubr.f32.gmra.mrb[0].mxu0 %v39
    %v112 = vpop.f32.mrb[0].mxu0
    %v113 = vadd.f32 %v32, %v112
    %v114 = vpop.f32.mrb[0].mxu0
    %115 = vdwg.mxu0
    %v116 = vmax.f32 %v108, 0.0
    %v117 = vmax.f32 %v113, 0.0
    %v118 = vld [vmem:[%s3] sm:$0xff]
    %v119 = vld [vmem:[%s3 + $0x8] sm:$0xff]
    %v120 = vld [vmem:[%s3 + $0x10] sm:$0xff]
    %v121 = vld [vmem:[%s3 + $0x18] sm:$0xff]
    %v122 = vld [vmem:[%s3 + $0x20] sm:$0xff]
    %v123 = vld [vmem:[%s3 + $0x28] sm:$0xff]
    %v124 = vld [vmem:[%s3 + $0x30] sm:$0xff]
    %v125 = vld [vmem:[%s3 + $0x38] sm:$0xff]
    %v126 = vld [vmem:[%s4] sm:$0x1]
    %v128 = vlaneseq
    %v129 = vshrl.u32 %v128, 7
    %v130 = vsub.s32 0, %v129
    %v131 = vrot.slane %v126, %v130
    %vm133 = vcmask 523264
    %v135 = vsel %vm133, %v116, 0
    %v138 = vsel %vm133, %v117, 0
    %140 = vmatprep.subr.mxu0 0.0
    %141 = vmatpush1.msra.mxu0 %v118
    %142 = vmatprep.subr.mxu0 0.0
    %143 = vmatpush1.msra.mxu0 %v119
    %144 = vmatprep.subr.mxu0 0.0
    %145 = vmatpush1.msra.mxu0 %v120
    %146 = vmatprep.subr.mxu0 0.0
    %147 = vmatpush1.msra.mxu0 %v121
    %148 = vmatprep.subr.mxu0 0.0
    %149 = vmatpush1.msra.mxu0 %v122
    %150 = vmatprep.subr.mxu0 0.0
    %151 = vmatpush1.msra.mxu0 %v123
    %152 = vmatprep.subr.mxu0 0.0
    %153 = vmatpush1.msra.mxu0 %v124
    %154 = vmatprep.subr.mxu0 0.0
    %155 = vmatpush1.msra.mxu0 %v125
    %156 = vmatprep.subr.mxu0 0.0
    %157 = vmatpush1.msra.mxu0 0.0
    %158 = vmatprep.subr.mxu0 0.0
    %159 = vmatpush1.msra.mxu0 0.0
    %160 = vmatprep.subr.mxu0 0.0
    %161 = vmatpush1.msra.mxu0 0.0
    %162 = vmatprep.subr.mxu0 0.0
    %163 = vmatpush1.msra.mxu0 0.0
    %164 = vmatprep.subr.mxu0 0.0
    %165 = vmatpush1.msra.mxu0 0.0
    %166 = vmatprep.subr.mxu0 0.0
    %167 = vmatpush1.msra.mxu0 0.0
    %168 = vmatprep.subr.mxu0 0.0
    %169 = vmatpush1.msra.mxu0 0.0
    %170 = vmatprep.subr.mxu0 0.0
    %171 = vmatpush1.msra.mxu0 0.0
    %172 = vmatprep.subr.mxu0 0.0
    %173 = vmatpush1.msra.mxu0 0.0
    %174 = vmatprep.subr.mxu0 0.0
    %175 = vmatpush1.msra.mxu0 0.0
    %176 = vmatprep.subr.mxu0 0.0
    %177 = vmatpush1.msra.mxu0 0.0
    %178 = vmatprep.subr.mxu0 0.0
    %179 = vmatpush1.msra.mxu0 0.0
    %180 = vmatprep.subr.mxu0 0.0
    %181 = vmatpush1.msra.mxu0 0.0
    %182 = vmatprep.subr.mxu0 0.0
    %183 = vmatpush1.msra.mxu0 0.0
    %184 = vmatprep.subr.mxu0 0.0
    %185 = vmatpush1.msra.mxu0 0.0
    %186 = vmatprep.subr.mxu0 0.0
    %187 = vmatpush1.msra.mxu0 0.0
    %188 = vmatprep.subr.mxu0 0.0
    %189 = vmatpush1.msra.mxu0 0.0
    %190 = vmatprep.subr.mxu0 0.0
    %191 = vmatpush1.msra.mxu0 0.0
    %192 = vmatprep.subr.mxu0 0.0
    %193 = vmatpush1.msra.mxu0 0.0
    %194 = vmatprep.subr.mxu0 0.0
    %195 = vmatpush1.msra.mxu0 0.0
    %196 = vmatprep.subr.mxu0 0.0
    %197 = vmatpush1.msra.mxu0 0.0
    %198 = vmatprep.subr.mxu0 0.0
    %199 = vmatpush1.msra.mxu0 0.0
    %200 = vmatprep.subr.mxu0 0.0
    %201 = vmatpush1.msra.mxu0 0.0
    %202 = vmatprep.subr.mxu0 0.0
    %203 = vmatpush1.msra.mxu0 0.0
    %204 = vmatprep.mubr.f32.mxu0 0.0
    %205 = vmatmul.mubr.f32.gmra.mrb[0].mxu0 %v135
    %v206 = vpop.f32.mrb[0].mxu0
    %v207 = vadd.f32 %v131, %v206
    %v208 = vpop.f32.mrb[0].mxu0
    %209 = vmatprep.mubr.f32.mxu0 0.0
    %210 = vmatmul.mubr.f32.gmra.mrb[0].mxu0 %v138
    %v211 = vpop.f32.mrb[0].mxu0
    %v212 = vadd.f32 %v131, %v211
    %v213 = vpop.f32.mrb[0].mxu0
    %214 = vdwg.mxu0
    %215 = vst.msk [vmem:[#allocation2] sm:$0xff] %vm34, %v207
    %216 = vst.msk [vmem:[#allocation2 + $0x8] sm:$0xff] %vm34, %v212
    // Predicated region
    $region22: #{mlp_forward.1} parent=1 // pred_check
      _
    $region23: #{mlp_forward.1} parent=1 // pred_check_branch
      %218 = sbr.rel (0) target = $region25
    $region24: #{mlp_forward.1} parent=1 // pred_region
      %s220 = ssub.s32 256, 256
      %221 = vsyncadd [#allocation3], %s220
      %s222 = sshll.u32 [#allocation2], 4
      %s223 = int_to_ptr.vmem [resolvable:$true] %s222
      %228 = dma.vmem_to_hbm [thread:$0]  %s223, 256, %s5, [#allocation3], 128, 128, 8
    $region25: #{mlp_forward.1} parent=1 // pred_fallthru
      _
    // Predicated region
    $region26: #{mlp_forward.1} parent=1 // pred_check
      _
    $region27: #{mlp_forward.1} parent=1 // pred_check_branch
      %230 = sbr.rel (0) target = $region29
    $region28: #{mlp_forward.1} parent=1 // pred_region
      %231 = dma.done [#allocation3], 256
    $region29: #{mlp_forward.1} parent=1 // pred_fallthru
      _
    %232 = vsyncpa [#allocation3], 1

</llo_original>
